<compile_context>
chip_gen: v5e
topology: v5e:2x2
jax: 0.10.0
libtpu: 0.0.40
codegen_flags: <defaults>
</compile_context>

<pallas_src>
import functools

import jax
import jax.numpy as jnp
from jax.experimental import pallas as pl
from jax.experimental.pallas import tpu as pltpu


# ---------------------------- static hyper-parameters ---------------------------- #
IN_CHANNELS = 4
OUT_CHANNELS = 8
KERNEL_SIZE = 3
STRIDE = 1
DILATION = 1
PADDING = 1
BN_EPS = 0.001
LANE = 128          # TPU lane width


def _out_length(t_in):
    return (t_in + 2 * PADDING - DILATION * (KERNEL_SIZE - 1) - 1) // STRIDE + 1


def _round_up(x, m):
    return ((x + m - 1) // m) * m


# ----------------------------------- kernel -------------------------------------- #
def jasper_subblock_kernel(lens_ref,            # scalar-prefetch: (B,) int32 in SMEM
                           x_ref,               # (1, C_in, T_in_pad)   zero-halo padded
                           w_ref,               # (C_out, K*C_in)       BN-scale folded
                           shift_ref,           # (C_out, 1)            BN shift
                           res_ref,             # (1, C_out, T_TILE)
                           o_ref,               # (1, C_out, T_TILE)
                           *,
                           t_tile):
    b = pl.program_id(0)
    seq_len = lens_ref[b]                       # scalar int32 from SMEM

    x = x_ref[0]                                # (C_in, T_in_pad) f32
    t_in_pad = x.shape[1]

    # Sequence mask in ORIGINAL time coords (t = tp - PADDING): zero t >= seq_len.
    # (1, T) iota broadcast over the channel axis (cheaper than a (C_in, T) iota).
    # The left halo column(s) are already zero from the wrapper-side pad.
    t_idx = jax.lax.broadcasted_iota(jnp.int32, (1, t_in_pad), 1)
    x = jnp.where((t_idx - PADDING) < seq_len, x, 0.0)

    # im2col: K shifted views stacked along the sublane axis -> (K*C_in, T_TILE).
    # Row ordering is k-major / ci-minor, matching the wrapper's weight reshape.
    # (STRIDE == 1 here; for STRIDE > 1, take strided pl.ds slices at the ref level.)
    xcol = jnp.concatenate(
        [x[:, k * DILATION: k * DILATION + t_tile] for k in range(KERNEL_SIZE)],
        axis=0)

    # Single MXU matmul; BatchNorm scale is pre-folded into the weight.
    acc = jnp.dot(w_ref[...], xcol, preferred_element_type=jnp.float32)   # (C_out, T_TILE)

    # BN shift, residual add, ReLU (dropout = identity in eval mode).
    out = acc + shift_ref[...] + res_ref[0]
    out = jnp.maximum(out, 0.0)

    o_ref[0] = out.astype(o_ref.dtype)


# ---------------------------------- wrapper --------------------------------------- #
def jasper_subblock(inputs, input_lengths, weight, gamma, beta, running_mean,
                    running_var, residual):
    """inputs: (B, C_in, T) f32; input_lengths: (B,) int32; residual: (B, C_out, T_out)."""
    B, c_in, T = inputs.shape
    c_out = weight.shape[0]
    t_out = _out_length(T)

    # Lane-dense output tile: round the output time axis up to a multiple of 128.
    tt_out = max(_round_up(t_out, LANE), LANE)
    # Input window needed to produce tt_out outputs (includes the conv halo).
    t_in_needed = (tt_out - 1) * STRIDE + (KERNEL_SIZE - 1) * DILATION + 1
    t_in_pad = _round_up(t_in_needed, LANE)

    # One wrapper-side pad serves both the conv zero-halo and lane rounding.
    x_pad = jnp.pad(inputs, ((0, 0), (0, 0), (PADDING, t_in_pad - PADDING - T)))
    res_pad = jnp.pad(residual, ((0, 0), (0, 0), (0, tt_out - t_out)))

    # Fold eval-mode BatchNorm: scale into the conv weight, keep only the shift.
    scale = (gamma / jnp.sqrt(running_var + BN_EPS)).astype(jnp.float32)       # (C_out,)
    w_folded = weight.astype(jnp.float32) * scale[:, None, None]               # (C_out, C_in, K)
    # im2col weight layout: (C_out, K*C_in), k-major / ci-minor (matches kernel concat).
    w2 = jnp.transpose(w_folded, (0, 2, 1)).reshape(c_out, KERNEL_SIZE * c_in)
    shift = (beta - running_mean * scale).reshape(c_out, 1).astype(jnp.float32)

    kernel = functools.partial(jasper_subblock_kernel, t_tile=tt_out)

    grid_spec = pltpu.PrefetchScalarGridSpec(
        num_scalar_prefetch=1,
        grid=(B,),
        in_specs=[
            pl.BlockSpec((1, c_in, t_in_pad), lambda b, lens: (b, 0, 0)),            # x_pad
            pl.BlockSpec((c_out, KERNEL_SIZE * c_in), lambda b, lens: (0, 0)),       # w2
            pl.BlockSpec((c_out, 1), lambda b, lens: (0, 0)),                        # shift
            pl.BlockSpec((1, c_out, tt_out), lambda b, lens: (b, 0, 0)),             # residual
        ],
        out_specs=pl.BlockSpec((1, c_out, tt_out), lambda b, lens: (b, 0, 0)),
    )

    out_padded = pl.pallas_call(
        kernel,
        grid_spec=grid_spec,
        out_shape=jax.ShapeDtypeStruct((B, c_out, tt_out), jnp.float32),
        compiler_params=pltpu.CompilerParams(dimension_semantics=("parallel",)),
    )(input_lengths.astype(jnp.int32), x_pad, w2, shift, res_pad)

    out = out_padded[:, :, :t_out]
    output_lengths = (input_lengths + 2 * PADDING
                      - DILATION * (KERNEL_SIZE - 1) - 1) // STRIDE + 1
    return out, output_lengths


# ----------------------------- pure-JAX reference ---------------------------------- #
def reference(inputs, input_lengths, weight, gamma, beta, running_mean,
              running_var, residual):
    T = inputs.shape[2]
    mask = jnp.arange(T)[None, :] >= input_lengths[:, None]
    x = jnp.where(mask[:, None, :], 0.0, inputs)
    out = jax.lax.conv_general_dilated(
        x, weight, window_strides=(STRIDE,), padding=[(PADDING, PADDING)],
        rhs_dilation=(DILATION,), dimension_numbers=("NCH", "OIH", "NCH"))
    scale = gamma / jnp.sqrt(running_var + BN_EPS)
    shift = beta - running_mean * scale
    out = out * scale[None, :, None] + shift[None, :, None]
    out = out + residual
    out = jnp.maximum(out, 0.0)
    out_len = (input_lengths + 2 * PADDING
               - DILATION * (KERNEL_SIZE - 1) - 1) // STRIDE + 1
    return out, out_len


# ------------------------------------ main ----------------------------------------- #
if __name__ == "__main__":
    B, T = 2, 16
    key = jax.random.PRNGKey(0)
    k_x, k_w, k_g, k_b, k_m, k_v, k_r = jax.random.split(key, 7)

    inputs = jax.random.normal(k_x, (B, IN_CHANNELS, T), dtype=jnp.float32)
    input_lengths = jnp.array([16, 11], dtype=jnp.int32)

    # Deterministic synthetic parameters (shapes from MaskConv1d / BatchNorm1d __init__).
    weight = jax.random.normal(k_w, (OUT_CHANNELS, IN_CHANNELS, KERNEL_SIZE),
                               dtype=jnp.float32) * 0.1
    gamma = 1.0 + 0.1 * jax.random.normal(k_g, (OUT_CHANNELS,), dtype=jnp.float32)
    beta = 0.1 * jax.random.normal(k_b, (OUT_CHANNELS,), dtype=jnp.float32)
    running_mean = 0.1 * jax.random.normal(k_m, (OUT_CHANNELS,), dtype=jnp.float32)
    running_var = jnp.abs(1.0 + 0.1 * jax.random.normal(k_v, (OUT_CHANNELS,),
                                                        dtype=jnp.float32))

    t_out = _out_length(T)
    residual = jax.random.normal(k_r, (B, OUT_CHANNELS, t_out), dtype=jnp.float32)

    out, out_len = jasper_subblock(inputs, input_lengths, weight, gamma, beta,
                                   running_mean, running_var, residual)
    jax.block_until_ready(out)

    ref_out, ref_len = reference(inputs, input_lengths, weight, gamma, beta,
                                 running_mean, running_var, residual)
    assert out.shape == (B, OUT_CHANNELS, t_out)
    assert jnp.allclose(out, ref_out, atol=1e-4, rtol=1e-4)
    assert jnp.array_equal(out_len, ref_len)

    print("KERNEL_OK")
</pallas_src>

<mosaic_0001>
module attributes {stable_mosaic.version = 11 : i64} {
  func.func @jasper_subblock_kernel(%arg0: i32, %arg1: memref<2xi32, #tpu.memory_space<smem>>, %arg2: memref<1x4x256xf32, #tpu.memory_space<vmem>>, %arg3: memref<8x12xf32, #tpu.memory_space<vmem>>, %arg4: memref<8x1xf32, #tpu.memory_space<vmem>>, %arg5: memref<1x8x128xf32, #tpu.memory_space<vmem>>, %arg6: memref<1x8x128xf32, #tpu.memory_space<vmem>>) attributes {dimension_semantics = [#tpu.dimension_semantics<parallel>], iteration_bounds = array<i64: 2>, scalar_prefetch = 1 : i64, scratch_operands = 0 : i64, tpu.core_type = #tpu.core_type<tc>, window_params = [{transform_indices = @transform_0, window_bounds = array<i64: 1, 4, 256>}, {pipeline_mode = #tpu.pipeline_mode<synchronous>, transform_indices = @transform_1, window_bounds = array<i64: 8, 12>}, {pipeline_mode = #tpu.pipeline_mode<synchronous>, transform_indices = @transform_2, window_bounds = array<i64: 8, 1>}, {transform_indices = @transform_3, window_bounds = array<i64: 1, 8, 128>}, {transform_indices = @transform_4, window_bounds = array<i64: 1, 8, 128>}]} {
    %0 = arith.index_cast %arg0 : i32 to index
    %1 = memref.load %arg1[%0] : memref<2xi32, #tpu.memory_space<smem>>
    %c0 = arith.constant 0 : index
    %c0_0 = arith.constant 0 : index
    %c0_1 = arith.constant 0 : index
    %2 = vector.load %arg2[%c0, %c0_0, %c0_1] : memref<1x4x256xf32, #tpu.memory_space<vmem>>, vector<1x4x256xf32>
    %3 = vector.shape_cast %2 : vector<1x4x256xf32> to vector<4x256xf32>
    %4 = tpu.iota {dimensions = array<i32: 1>} : vector<1x256xi32>
    %c1_i32 = arith.constant 1 : i32
    %5 = vector.broadcast %c1_i32 : i32 to vector<1x256xi32>
    %6 = arith.subi %4, %5 : vector<1x256xi32>
    %7 = vector.broadcast %1 : i32 to vector<1x256xi32>
    %8 = arith.cmpi slt, %6, %7 : vector<1x256xi32>
    %cst = arith.constant 0.000000e+00 : f32
    %9 = vector.shape_cast %8 : vector<1x256xi1> to vector<1x256xi1>
    %10 = vector.broadcast %9 : vector<1x256xi1> to vector<4x256xi1>
    %11 = vector.broadcast %cst : f32 to vector<4x256xf32>
    %12 = arith.select %10, %3, %11 : vector<4x256xi1>, vector<4x256xf32>
    %13 = vector.extract_strided_slice %12 {offsets = [0, 0], sizes = [4, 128], strides = [1, 1]} : vector<4x256xf32> to vector<4x128xf32>
    %14 = vector.extract_strided_slice %12 {offsets = [0, 1], sizes = [4, 128], strides = [1, 1]} : vector<4x256xf32> to vector<4x128xf32>
    %15 = vector.extract_strided_slice %12 {offsets = [0, 2], sizes = [4, 128], strides = [1, 1]} : vector<4x256xf32> to vector<4x128xf32>
    %16 = tpu.concatenate %13, %14, %15 in 0 : vector<4x128xf32>, vector<4x128xf32>, vector<4x128xf32> -> vector<12x128xf32>
    %c0_2 = arith.constant 0 : index
    %c0_3 = arith.constant 0 : index
    %17 = vector.load %arg3[%c0_2, %c0_3] : memref<8x12xf32, #tpu.memory_space<vmem>>, vector<8x12xf32>
    %cst_4 = arith.constant dense<0.000000e+00> : vector<8x128xf32>
    %18 = tpu.matmul %17, %16, %cst_4 {dimension_numbers = #tpu.dot_dimension_numbers<[1], [0], [0], [1], [0, 0, 1, 1], [], []>} : vector<8x12xf32>, vector<12x128xf32>, vector<8x128xf32> -> vector<8x128xf32>
    %c0_5 = arith.constant 0 : index
    %c0_6 = arith.constant 0 : index
    %19 = vector.load %arg4[%c0_5, %c0_6] : memref<8x1xf32, #tpu.memory_space<vmem>>, vector<8x1xf32>
    %20 = vector.broadcast %19 : vector<8x1xf32> to vector<8x128xf32>
    %21 = arith.addf %18, %20 : vector<8x128xf32>
    %c0_7 = arith.constant 0 : index
    %c0_8 = arith.constant 0 : index
    %c0_9 = arith.constant 0 : index
    %22 = vector.load %arg5[%c0_7, %c0_8, %c0_9] : memref<1x8x128xf32, #tpu.memory_space<vmem>>, vector<1x8x128xf32>
    %23 = vector.shape_cast %22 : vector<1x8x128xf32> to vector<8x128xf32>
    %24 = arith.addf %21, %23 : vector<8x128xf32>
    %cst_10 = arith.constant 0.000000e+00 : f32
    %25 = vector.broadcast %cst_10 : f32 to vector<8x128xf32>
    %26 = arith.maximumf %24, %25 : vector<8x128xf32>
    %c0_11 = arith.constant 0 : index
    %c0_12 = arith.constant 0 : index
    %c0_13 = arith.constant 0 : index
    %27 = vector.load %arg6[%c0_11, %c0_12, %c0_13] : memref<1x8x128xf32, #tpu.memory_space<vmem>>, vector<1x8x128xf32>
    %28 = vector.shape_cast %27 : vector<1x8x128xf32> to vector<8x128xf32>
    %29 = vector.shape_cast %26 : vector<8x128xf32> to vector<1x8x128xf32>
    tpu.vector_store %arg6[%c0_11, %c0_12, %c0_13], %29 {strides = array<i32>} : memref<1x8x128xf32, #tpu.memory_space<vmem>>, vector<1x8x128xf32>,
    return
  }
  func.func @transform_0(%arg0: i32, %arg1: memref<2xi32, #tpu.memory_space<smem>>) -> (i32, i32, i32) {
    %c0_i32 = arith.constant 0 : i32
    %c0_i32_0 = arith.constant 0 : i32
    %c0_i32_1 = arith.constant 0 : i32
    return %arg0, %c0_i32, %c0_i32_0 : i32, i32, i32
  }
  func.func @transform_1(%arg0: i32, %arg1: memref<2xi32, #tpu.memory_space<smem>>) -> (i32, i32) {
    %c0_i32 = arith.constant 0 : i32
    %c0_i32_0 = arith.constant 0 : i32
    %c0_i32_1 = arith.constant 0 : i32
    return %c0_i32, %c0_i32_0 : i32, i32
  }
  func.func @transform_2(%arg0: i32, %arg1: memref<2xi32, #tpu.memory_space<smem>>) -> (i32, i32) {
    %c0_i32 = arith.constant 0 : i32
    %c0_i32_0 = arith.constant 0 : i32
    %c0_i32_1 = arith.constant 0 : i32
    return %c0_i32, %c0_i32_0 : i32, i32
  }
  func.func @transform_3(%arg0: i32, %arg1: memref<2xi32, #tpu.memory_space<smem>>) -> (i32, i32, i32) {
    %c0_i32 = arith.constant 0 : i32
    %c0_i32_0 = arith.constant 0 : i32
    %c0_i32_1 = arith.constant 0 : i32
    return %arg0, %c0_i32, %c0_i32_0 : i32, i32, i32
  }
  func.func @transform_4(%arg0: i32, %arg1: memref<2xi32, #tpu.memory_space<smem>>) -> (i32, i32, i32) {
    %c0_i32 = arith.constant 0 : i32
    %c0_i32_0 = arith.constant 0 : i32
    %c0_i32_1 = arith.constant 0 : i32
    return %arg0, %c0_i32, %c0_i32_0 : i32, i32, i32
  }
}

</mosaic_0001>

<llo_original>
// kernel: tpu_custom_call.1
$region0: #{tpu_custom_call.1}
  #allocation0 [shape = 'u32[]', space=smem, size = 0x4, offset = 0x4, fixed_abs, tag = 'smem constant byte address 0x4 - core index']
  #allocation1 [shape = 'u32[72,128]{1,0:T(1,128)}', space=vmem, size = 0x9000, scoped, tag = 'internal scratch']
  #allocation2 [shape = 's32[1]{0}', space=sflag, size = 0x4, scoped, tag = 'scoped memory for tpu_custom_call.1']
  #allocation3 [shape = 'u8[512]{0}', space=smem, size = 0x200, scoped, tag = 'prefetched SMEM operand 0']
  %s0 = inlined_call_operand.vmem [shape: s32[2], index: 0, kind: input, shape index: {}]
  %s1 = inlined_call_operand.hbm [shape: f32[2,4,256], index: 1, kind: input, shape index: {}]
  %s2 = inlined_call_operand.vmem [shape: f32[8,12], index: 2, kind: input, shape index: {}]
  %s3 = inlined_call_operand.vmem [shape: f32[8,1], index: 3, kind: input, shape index: {}]
  %s4 = inlined_call_operand.hbm [shape: f32[2,8,128], index: 4, kind: input, shape index: {}]
  %s5 = inlined_call_operand.hbm [shape: f32[2,8,128], index: 5, kind: output, shape index: {}]
  %s6 = sld [smem:[#allocation0]]
  $region57: #{tpu_custom_call.1} parent=0
    _
  %s8 = ssub.s32 1, %s6
  %s9 = scalar_select 0, %s8, %s6
  %s11 = sshll.u32 %s0, 4
  %s12 = int_to_ptr.vmem [resolvable:$true] %s11
  %14 = dma.vmem_to_smem %s12, 16, [#allocation3], [#allocation2]
  %16 = dma.done [#allocation2], 16
  %17 = sfence
  $region1: #{tpu_custom_call.1} parent=0
    #allocation4 [shape = 'u8[8192]{0}', space=vmem, size = 0x2000, scoped, tag = 'input window, operand 1']
    #allocation5 [shape = 's32[2]{0}', space=sflag, size = 0x8, scoped, tag = 'scoped memory for tpu_custom_call.1']
    #allocation6 [shape = 's32[2]{0}', space=sflag, size = 0x8, scoped, tag = 'scoped memory for tpu_custom_call.1']
    #allocation7 [shape = 'u8[8192]{0}', space=vmem, size = 0x2000, scoped, tag = 'input window, operand 4']
    #allocation8 [shape = 's32[2]{0}', space=sflag, size = 0x8, scoped, tag = 'scoped memory for tpu_custom_call.1']
    #allocation9 [shape = 'u8[8192]{0}', space=vmem, size = 0x2000, scoped, tag = 'output window, operand 0']
    %18 = vsyncpa [#allocation5], 0
    %s19 = scalar_lea.sflag [#allocation5], 1
    %20 = vsyncpa %s19, 0
    %21 = vsyncpa [#allocation8], 0
    %s22 = scalar_lea.sflag [#allocation8], 1
    %23 = vsyncpa %s22, 0
    %24 = vsyncpa [#allocation6], 0
    %s25 = scalar_lea.sflag [#allocation6], 1
    %26 = vsyncpa %s25, 0
    loop: start=0, step=1, limit=4
    $region2: #{tpu_custom_call.1} parent=1 // loop_pre_header
      _
    $region3: #{tpu_custom_call.1} parent=1 // loop_header
      %s28 = sphi 0, %s32
      %p29 = scmp.ge.s32.totalorder %s28, 4
      %s38 = sphi 0, %s40
      %s41 = sphi 0, %s38
      %s42 = sphi 0, %s41
      %s58 = sphi 0, %s42
      %s62 = sphi 0, %s62
      %s64 = sphi 0, %s62
      %s65 = sphi 0, %s64
      %s79 = sphi 0, %s65
      %s83 = sphi 0, %s83
      %s85 = sphi 0, %s83
      %s86 = sphi 0, %s85
      %s100 = sphi 0, %s86
      %s106 = sphi 0, %s108
      %s109 = sphi 0, %s106
      %s110 = sphi 0, %s109
      %s126 = sphi 0, %s110
      %s132 = sphi 0, %s134
      %s135 = sphi 0, %s132
      %s136 = sphi 0, %s135
      %s152 = sphi 0, %s136
    $region4: #{tpu_custom_call.1} parent=1 // loop_header_branch
      %31 = sbr.rel (%p29) target = $region8
    $region5: #{tpu_custom_call.1} parent=1 // loop_body
      %s33 = ssub.s32 %s28, 1
      %s34 = ssub.s32 %s28, 2
      %s35 = sadd.s32 %s28, 1
      %s36 = ssub.s32 %s28, %s35
      %p37 = scmp.eq.s32.totalorder %s36, 0
      %s39 = sadd.s32 %s38, 1
      %s40 = scalar_select %p37, %s38, %s39
      %p43 = pneg %p37
      %p44 = scmp.eq.s32.totalorder %s28, 1
      %p45 = por %p43, %p44
      %p46 = scmp.ne.s32.totalorder %s38, %s41
      %p47 = scmp.eq.s32.totalorder %s28, 0
      %p48 = por %p46, %p47
      %p49 = scmp.ne.s32.totalorder %s38, %s41
      %p50 = scmp.eq.s32.totalorder %s33, 1
      %p51 = por %p49, %p50
      %p52 = scmp.ne.s32.totalorder %s41, %s42
      %p53 = scmp.eq.s32.totalorder %s33, 0
      %p54 = por %p52, %p53
      %p55 = scmp.ne.s32.totalorder %s41, %s42
      %p56 = scmp.eq.s32.totalorder %s34, 1
      %p57 = por %p55, %p56
      %p59 = scmp.ne.s32.totalorder %s42, %s58
      %p60 = scmp.eq.s32.totalorder %s34, 0
      %p61 = por %p59, %p60
      %s63 = sadd.s32 %s62, 1
      %p66 = scmp.eq.s32.totalorder %s28, 1
      %p67 = scmp.ne.s32.totalorder %s62, %s64
      %p68 = scmp.eq.s32.totalorder %s28, 0
      %p69 = por %p67, %p68
      %p70 = scmp.ne.s32.totalorder %s62, %s64
      %p71 = scmp.eq.s32.totalorder %s33, 1
      %p72 = por %p70, %p71
      %p73 = scmp.ne.s32.totalorder %s64, %s65
      %p74 = scmp.eq.s32.totalorder %s33, 0
      %p75 = por %p73, %p74
      %p76 = scmp.ne.s32.totalorder %s64, %s65
      %p77 = scmp.eq.s32.totalorder %s34, 1
      %p78 = por %p76, %p77
      %p80 = scmp.ne.s32.totalorder %s65, %s79
      %p81 = scmp.eq.s32.totalorder %s34, 0
      %p82 = por %p80, %p81
      %s84 = sadd.s32 %s83, 1
      %p87 = scmp.eq.s32.totalorder %s28, 1
      %p88 = scmp.ne.s32.totalorder %s83, %s85
      %p89 = scmp.eq.s32.totalorder %s28, 0
      %p90 = por %p88, %p89
      %p91 = scmp.ne.s32.totalorder %s83, %s85
      %p92 = scmp.eq.s32.totalorder %s33, 1
      %p93 = por %p91, %p92
      %p94 = scmp.ne.s32.totalorder %s85, %s86
      %p95 = scmp.eq.s32.totalorder %s33, 0
      %p96 = por %p94, %p95
      %p97 = scmp.ne.s32.totalorder %s85, %s86
      %p98 = scmp.eq.s32.totalorder %s34, 1
      %p99 = por %p97, %p98
      %p101 = scmp.ne.s32.totalorder %s86, %s100
      %p102 = scmp.eq.s32.totalorder %s34, 0
      %p103 = por %p101, %p102
      %s104 = ssub.s32 %s28, %s35
      %p105 = scmp.eq.s32.totalorder %s104, 0
      %s107 = sadd.s32 %s106, 1
      %s108 = scalar_select %p105, %s106, %s107
      %p111 = pneg %p105
      %p112 = scmp.eq.s32.totalorder %s28, 1
      %p113 = por %p111, %p112
      %p114 = scmp.ne.s32.totalorder %s106, %s109
      %p115 = scmp.eq.s32.totalorder %s28, 0
      %p116 = por %p114, %p115
      %p117 = scmp.ne.s32.totalorder %s106, %s109
      %p118 = scmp.eq.s32.totalorder %s33, 1
      %p119 = por %p117, %p118
      %p120 = scmp.ne.s32.totalorder %s109, %s110
      %p121 = scmp.eq.s32.totalorder %s33, 0
      %p122 = por %p120, %p121
      %p123 = scmp.ne.s32.totalorder %s109, %s110
      %p124 = scmp.eq.s32.totalorder %s34, 1
      %p125 = por %p123, %p124
      %p127 = scmp.ne.s32.totalorder %s110, %s126
      %p128 = scmp.eq.s32.totalorder %s34, 0
      %p129 = por %p127, %p128
      %s130 = ssub.s32 %s28, %s35
      %p131 = scmp.eq.s32.totalorder %s130, 0
      %s133 = sadd.s32 %s132, 1
      %s134 = scalar_select %p131, %s132, %s133
      %p137 = pneg %p131
      %p138 = scmp.eq.s32.totalorder %s28, 1
      %p139 = por %p137, %p138
      %p140 = scmp.ne.s32.totalorder %s132, %s135
      %p141 = scmp.eq.s32.totalorder %s28, 0
      %p142 = por %p140, %p141
      %p143 = scmp.ne.s32.totalorder %s132, %s135
      %p144 = scmp.eq.s32.totalorder %s33, 1
      %p145 = por %p143, %p144
      %p146 = scmp.ne.s32.totalorder %s135, %s136
      %p147 = scmp.eq.s32.totalorder %s33, 0
      %p148 = por %p146, %p147
      %p149 = scmp.ne.s32.totalorder %s135, %s136
      %p150 = scmp.eq.s32.totalorder %s34, 1
      %p151 = por %p149, %p150
      %p153 = scmp.ne.s32.totalorder %s136, %s152
      %p154 = scmp.eq.s32.totalorder %s34, 0
      %p155 = por %p153, %p154
      %p156 = scmp.le.s32.totalorder 1, %s28
      %p157 = scmp.lt.s32.totalorder %s28, 3
      %p158 = pnand %p156, %p157
      %p159 = pneg %p158
      // Predicated region
      $region9: #{tpu_custom_call.1} parent=5 // pred_check
        _
      $region10: #{tpu_custom_call.1} parent=5 // pred_check_branch
        %161 = sbr.rel (%p158) target = $region12
      $region11: #{tpu_custom_call.1} parent=5 // pred_region
        %s162 = ssub.s32 %s28, 1
        // Predicated region
        $region13: #{tpu_custom_call.1} parent=11 // pred_check
          %p163 = pneg %p75
        $region14: #{tpu_custom_call.1} parent=11 // pred_check_branch
          %165 = sbr.rel (%p163) target = $region16
        $region15: #{tpu_custom_call.1} parent=11 // pred_region
          _
        $region16: #{tpu_custom_call.1} parent=11 // pred_fallthru
          _
        // Predicated region
        $region17: #{tpu_custom_call.1} parent=11 // pred_check
          %p166 = pneg %p96
        $region18: #{tpu_custom_call.1} parent=11 // pred_check_branch
          %168 = sbr.rel (%p166) target = $region20
        $region19: #{tpu_custom_call.1} parent=11 // pred_region
          _
        $region20: #{tpu_custom_call.1} parent=11 // pred_fallthru
          _
      $region12: #{tpu_custom_call.1} parent=5 // pred_fallthru
        _
      %p169 = scmp.lt.s32.totalorder %s28, 2
      // Predicated region
      $region21: #{tpu_custom_call.1} parent=5 // pred_check
        %p170 = pneg %p169
      $region22: #{tpu_custom_call.1} parent=5 // pred_check_branch
        %172 = sbr.rel (%p170) target = $region24
      $region23: #{tpu_custom_call.1} parent=5 // pred_region
        // Predicated region
        $region25: #{tpu_custom_call.1} parent=23 // pred_check
          %p173 = pneg %p48
        $region26: #{tpu_custom_call.1} parent=23 // pred_check_branch
          %175 = sbr.rel (%p173) target = $region28
        $region27: #{tpu_custom_call.1} parent=23 // pred_region
          %s176 = sand.u32 %s38, 1
          %s177 = scalar_lea.sflag [#allocation5], %s176
          %s178 = sand.u32 %s38, 1
          %s179 = smul.addr %s178, 8
          %s180 = scalar_lea.vmem [#allocation4], %s179
          %182 = vsyncadd %s177, 0
          %s183 = smul.addr %s28, 2
          %s184 = smul.addr %s183, 4
          %s185 = scalar_lea.hbm %s1, %s184
          %s187 = sshll.u32 %s185, 4
          %s188 = int_to_ptr.hbm [resolvable:$true] %s187
          %s189 = sshll.u32 %s180, 4
          %s190 = int_to_ptr.vmem [resolvable:$true] %s189
          %192 = dma.hbm_to_vmem [thread:$0]  %s188, 128, %s190, %s177
        $region28: #{tpu_custom_call.1} parent=23 // pred_fallthru
          _
        // Predicated region
        $region29: #{tpu_custom_call.1} parent=23 // pred_check
          %p193 = pneg %p116
        $region30: #{tpu_custom_call.1} parent=23 // pred_check_branch
          %195 = sbr.rel (%p193) target = $region32
        $region31: #{tpu_custom_call.1} parent=23 // pred_region
          %s196 = sand.u32 %s106, 1
          %s197 = scalar_lea.sflag [#allocation8], %s196
          %s198 = sand.u32 %s106, 1
          %s199 = smul.addr %s198, 8
          %s200 = scalar_lea.vmem [#allocation7], %s199
          %202 = vsyncadd %s197, 0
          %s203 = smul.addr %s28, 8
          %s204 = scalar_lea.hbm %s4, %s203
          %s206 = sshll.u32 %s204, 4
          %s207 = int_to_ptr.hbm [resolvable:$true] %s206
          %s208 = sshll.u32 %s200, 4
          %s209 = int_to_ptr.vmem [resolvable:$true] %s208
          %211 = dma.hbm_to_vmem [thread:$0]  %s207, 128, %s209, %s197
        $region32: #{tpu_custom_call.1} parent=23 // pred_fallthru
          _
      $region24: #{tpu_custom_call.1} parent=5 // pred_fallthru
        _
      %p212 = scmp.le.s32.totalorder 1, %s28
      %p213 = scmp.lt.s32.totalorder %s28, 3
      %p214 = pnand %p212, %p213
      %p215 = pneg %p214
      // Predicated region
      $region33: #{tpu_custom_call.1} parent=5 // pred_check
        _
      $region34: #{tpu_custom_call.1} parent=5 // pred_check_branch
        %217 = sbr.rel (%p214) target = $region36
      $region35: #{tpu_custom_call.1} parent=5 // pred_region
        %s218 = ssub.s32 %s28, 1
        %s219 = sand.u32 %s41, 1
        %s220 = scalar_lea.sflag [#allocation5], %s219
        %s221 = sand.u32 %s41, 1
        %s222 = smul.addr %s221, 8
        %s223 = scalar_lea.vmem [#allocation4], %s222
        // Predicated region
        $region37: #{tpu_custom_call.1} parent=35 // pred_check
          %p224 = pneg %p54
        $region38: #{tpu_custom_call.1} parent=35 // pred_check_branch
          %226 = sbr.rel (%p224) target = $region40
        $region39: #{tpu_custom_call.1} parent=35 // pred_region
          %228 = dma.done %s220, 128
        $region40: #{tpu_custom_call.1} parent=35 // pred_fallthru
          _
        %s229 = sand.u32 %s109, 1
        %s230 = scalar_lea.sflag [#allocation8], %s229
        %s231 = sand.u32 %s109, 1
        %s232 = smul.addr %s231, 8
        %s233 = scalar_lea.vmem [#allocation7], %s232
        // Predicated region
        $region41: #{tpu_custom_call.1} parent=35 // pred_check
          %p234 = pneg %p122
        $region42: #{tpu_custom_call.1} parent=35 // pred_check_branch
          %236 = sbr.rel (%p234) target = $region44
        $region43: #{tpu_custom_call.1} parent=35 // pred_region
          %238 = dma.done %s230, 128
        $region44: #{tpu_custom_call.1} parent=35 // pred_fallthru
          _
        %s239 = sand.u32 %s41, 1
        %s240 = scalar_lea.sflag [#allocation5], %s239
        %s241 = sand.u32 %s41, 1
        %s242 = smul.addr %s241, 8
        %s243 = scalar_lea.vmem [#allocation4], %s242
        %p244 = pneg %p54
        %p245 = pneg %p51
        %p246 = pneg %p75
        %p247 = pneg %p72
        %p248 = pneg %p96
        %p249 = pneg %p93
        %s250 = sand.u32 %s109, 1
        %s251 = scalar_lea.sflag [#allocation8], %s250
        %s252 = sand.u32 %s109, 1
        %s253 = smul.addr %s252, 8
        %s254 = scalar_lea.vmem [#allocation7], %s253
        %p255 = pneg %p122
        %p256 = pneg %p119
        %p257 = pneg %p148
        %p258 = pneg %p145
        %s259 = sand.u32 %s135, 1
        %s260 = scalar_lea.sflag [#allocation6], %s259
        %s261 = sand.u32 %s135, 1
        %s262 = smul.addr %s261, 8
        %s263 = scalar_lea.vmem [#allocation9], %s262
        %s264 = sld [smem:[#allocation3 + %s33]]
        %v265 = vld [vmem:[%s223] sm:$0xff]
        %v266 = vlaneseq
        %v267 = vand.u32 %v266, 127
        %v268 = vadd.s32 %v267, 128
        %v269 = vsub.s32 %v267, 1
        %v270 = vsub.s32 %v268, 1
        %v271 = vstv %s264
        %vm272 = vcmp.lt.s32.totalorder %v269, %v271
        %vm273 = vcmp.lt.s32.totalorder %v270, %v271
        %v274 = vsel %vm272, 1, 0
        %v275 = vsel %vm273, 1, 0
        %vm276 = vcmp.eq.s32.totalorder %v274, 1
        %vm277 = vcmp.eq.s32.totalorder %v275, 1
        %279 = vst [vmem:[#allocation1] ss:$2 sm:$0xff] %v265
        %v280 = vld.sshfl [vmem:[#allocation1] sm:$0xff pattern:$0x75316420]
        %v281 = vld.sshfl [vmem:[#allocation1 + $0x8] sm:$0xff pattern:$0x75316420]
        %v284 = vsel %vm276, %v280, 0.0
        %v285 = vsel %vm277, %v281, 0.0
        %v288 = vrot.slane %v284, 4
        %v289 = vrot.slane %v285, 4
        %290 = vrot.lane.b32.xlu0 %v288, 127
        %v291 = vpop.permute.xlu0 %290
        %292 = vrot.lane.b32.xlu0 %v289, 127
        %v293 = vpop.permute.xlu0 %292
        %vm294 = vcmask 1039360
        %v295 = vsel %vm294, %v291, %v293
        %297 = vrot.lane.b32.xlu0 %v284, 126
        %v298 = vpop.permute.xlu0 %297
        %299 = vrot.lane.b32.xlu0 %v285, 126
        %v300 = vpop.permute.xlu0 %299
        %vm301 = vcmask 1031168
        %v302 = vsel %vm301, %v298, %v300
        %vm303 = vcmask 1043456
        %v304 = vsel %vm303, %v284, %v295
        %v305 = vld [vmem:[%s2] sm:$0xff]
        %v306 = vld [vmem:[%s3] sm:$0xff]
        %308 = vset.pattern.permute.xlu0 0
        %309 = vperm.xlu0 %308, %v306
        %v310 = vpop.permute.xlu0 %309
        %vm312 = vcmask 97280
        %v314 = vsel %vm312, %v305, 0
        %v316 = vsel %vm303, %v302, 0
        %318 = vmatpush.msra.mxu0 0.0
        %319 = vmatpush.msra.mxu0 0.0
        %320 = vmatpush.msra.mxu0 0.0
        %321 = vmatpush.msra.mxu0 0.0
        %322 = vmatpush.msra.mxu0 0.0
        %323 = vmatpush.msra.mxu0 0.0
        %324 = vmatpush.msra.mxu0 0.0
        %325 = vmatpush.msra.mxu0 0.0
        %326 = vmatpush.msra.mxu0 0.0
        %327 = vmatpush.msra.mxu0 0.0
        %328 = vmatpush.msra.mxu0 0.0
        %329 = vmatpush.msra.mxu0 0.0
        %330 = vmatpush.msra.mxu0 0.0
        %331 = vmatpush.msra.mxu0 0.0
        %332 = vmatpush.msra.mxu0 %v316
        %333 = vmatpush.msra.mxu0 %v304
        %334 = vmatmul.f32.gmra.mxu0 %v314
        %v335 = vpop.f32.mrf.mxu0
        %v336 = vadd.f32 %v310, %v335
        %337 = vdwg.mxu0
        %v338 = vld [vmem:[%s233] sm:$0xff]
        %v339 = vadd.f32 %v336, %v338
        %v340 = vmax.f32 %v339, 0.0
        %341 = vst [vmem:[%s263] sm:$0xff] %v340
        %s342 = sand.u32 %s135, 1
        %s343 = scalar_lea.sflag [#allocation6], %s342
        %s344 = sand.u32 %s135, 1
        %s345 = smul.addr %s344, 8
        %s346 = scalar_lea.vmem [#allocation9], %s345
        // Predicated region
        $region45: #{tpu_custom_call.1} parent=35 // pred_check
          %p347 = pneg %p145
        $region46: #{tpu_custom_call.1} parent=35 // pred_check_branch
          %349 = sbr.rel (%p347) target = $region48
        $region47: #{tpu_custom_call.1} parent=35 // pred_region
          %351 = vsyncadd %s343, 0
          %s352 = smul.addr %s33, 8
          %s353 = scalar_lea.hbm %s5, %s352
          %s355 = sshll.u32 %s346, 4
          %s356 = int_to_ptr.vmem [resolvable:$true] %s355
          %s357 = sshll.u32 %s353, 4
          %s358 = int_to_ptr.hbm [resolvable:$true] %s357
          %360 = dma.vmem_to_hbm [thread:$0]  %s356, 128, %s358, %s343
        $region48: #{tpu_custom_call.1} parent=35 // pred_fallthru
          _
      $region36: #{tpu_custom_call.1} parent=5 // pred_fallthru
        _
      %p361 = scmp.le.s32.totalorder 2, %s28
      // Predicated region
      $region49: #{tpu_custom_call.1} parent=5 // pred_check
        %p362 = pneg %p361
      $region50: #{tpu_custom_call.1} parent=5 // pred_check_branch
        %364 = sbr.rel (%p362) target = $region52
      $region51: #{tpu_custom_call.1} parent=5 // pred_region
        %s365 = ssub.s32 %s28, 2
        // Predicated region
        $region53: #{tpu_custom_call.1} parent=51 // pred_check
          %p366 = pneg %p151
        $region54: #{tpu_custom_call.1} parent=51 // pred_check_branch
          %368 = sbr.rel (%p366) target = $region56
        $region55: #{tpu_custom_call.1} parent=51 // pred_region
          %s369 = sand.u32 %s136, 1
          %s370 = scalar_lea.sflag [#allocation6], %s369
          %s371 = sand.u32 %s136, 1
          %s372 = smul.addr %s371, 8
          %s373 = scalar_lea.vmem [#allocation9], %s372
          %375 = dma.done %s370, 128
        $region56: #{tpu_custom_call.1} parent=51 // pred_fallthru
          _
      $region52: #{tpu_custom_call.1} parent=5 // pred_fallthru
        _
    $region6: #{tpu_custom_call.1} parent=1 // loop_footer
      %s32 = sadd.s32 1, %s28
    $region7: #{tpu_custom_call.1} parent=1 // loop_footer_branch
      %27 = sbr.rel target = $region3
    $region8: #{tpu_custom_call.1} parent=1 // loop_exit
      _
    %376 = vsyncpa [#allocation5], 1
    %s377 = scalar_lea.sflag [#allocation5], 1
    %378 = vsyncpa %s377, 1
    %379 = vsyncpa [#allocation8], 1
    %s380 = scalar_lea.sflag [#allocation8], 1
    %381 = vsyncpa %s380, 1
    %382 = vsyncpa [#allocation6], 1
    %s383 = scalar_lea.sflag [#allocation6], 1
    %384 = vsyncpa %s383, 1

</llo_original>
